<compile_context>
chip_gen: v6e
topology: v6e:2x2x1
jax: 0.10.0
libtpu: 0.0.40
codegen_flags: <defaults>
</compile_context>

<pallas_src>
import functools
import math

import jax
import jax.numpy as jnp
from jax import lax
from jax.experimental import pallas as pl
from jax.experimental.pallas import tpu as pltpu


def _if_neuron_chunk_kernel(
    x_ref,        # (Tc, R, L) bf16  folded presynaptic input for this time chunk
    v_in_ref,     # (R, L)     f32   initial membrane voltage
    tr_in_ref,    # (R, L)     f32   initial trace
    rc_in_ref,    # (R, L)     f32   initial refractory counters
    spikes_out,   # (Tc, R, L) int8  per-timestep spikes (0/1; viewed as bool outside)
    trace_out,    # (Tc, R, L) f32   per-timestep trace
    v_state,      # (R, L)     f32   resident accumulator (HBM-aliased with v_in)
    rc_state,     # (R, L)     f32   resident accumulator (HBM-aliased with rc_in)
    tr_scratch,   # (R, L)     f32   VMEM scratch carrying trace across chunks
    *,
    tc: int,
    thresh: float,
    alpha_v: float,
    alpha_t: float,
    tau_t: float,
    v_rest: float,
    dt: float,
    duration_refrac: float,
):
    c = pl.program_id(0)

    # Load initial state once; v/rc live in resident output blocks across the whole
    # grid, trace lives in a VMEM scratch (no HBM state stream for it).
    @pl.when(c == 0)
    def _init():
        v_state[...] = v_in_ref[...]
        rc_state[...] = rc_in_ref[...]
        tr_scratch[...] = tr_in_ref[...]

    def step(t, carry):
        v, tr, rc = carry

        # Folded incoming spikes for this timestep: bf16 in HBM/VMEM, f32 math.
        x_fold = x_ref[t].astype(jnp.float32)

        # if_voltage_update: only non-refractory cells integrate (rc clamped at 0,
        # so rc <= 0 is the robust equivalent of the reference's rc == 0 check).
        v = jnp.where(rc <= 0.0, v + alpha_v * x_fold, v)

        # spiking()
        spikes = v >= thresh
        s_f = spikes.astype(jnp.float32)

        # linear_trace_update
        tr = tr * tau_t + alpha_t * s_f

        # refrac(): decrement active counters, add duration_refrac for new spikes.
        # NOTE: Python-level branch is baked at trace time; retrace if duration_refrac
        # changes sign.
        if duration_refrac > 0:
            rc = jnp.maximum(rc - dt, 0.0) + duration_refrac * s_f

        # masked_fill: spiking cells reset to resting voltage.
        v = jnp.where(spikes, jnp.float32(v_rest), v)

        spikes_out[t] = spikes.astype(jnp.int8)
        trace_out[t] = tr
        return (v, tr, rc)

    v_f, tr_f, rc_f = lax.fori_loop(
        0, tc, step,
        (v_state[...], tr_scratch[...], rc_state[...]),
        unroll=True,
    )
    v_state[...] = v_f
    tr_scratch[...] = tr_f
    rc_state[...] = rc_f


def if_neuron_forward_sequence(
    x_seq,     # (T,) + cells_shape + (S,)  incoming presynaptic spikes
    v_cell,    # cells_shape f32
    trace,     # cells_shape f32
    refrac,    # cells_shape f32
    *,
    thresh: float,
    alpha_v: float,
    alpha_t: float,
    tau_t: float,
    v_rest: float,
    dt: float,
    duration_refrac: float,
    max_time_chunk: int = 128,
):
    """Runs T IFNeuron forward steps in a single fused pallas_call.

    Returns ((spikes[T, ...] bool, trace[T, ...]), (v, trace, refrac)) — the per-step
    outputs the module's forward returns, plus the final state buffers.
    """
    cells_shape = v_cell.shape
    T = x_seq.shape[0]
    assert T >= 1
    n_cells = math.prod(cells_shape)
    L = 128
    assert n_cells % L == 0, "cell count must be a multiple of 128 for this lane-dense layout"
    R = n_cells // L

    # Time chunk: at the demo size one chunk covers the whole sequence (one grid step).
    tc = T if T <= max_time_chunk else max_time_chunk
    while T % tc != 0:
        tc -= 1
    n_chunks = T // tc

    # fold(): sum over incoming synapses done in XLA on the contiguous minor dim.
    # Sum in f32, then store as bf16 — spike counts <= S (<= 256) are exact in bf16,
    # halving the dominant per-step HBM read into the kernel.
    x_fold = x_seq.astype(jnp.float32).sum(axis=-1).astype(jnp.bfloat16).reshape(T, R, L)

    flat = lambda a: a.reshape(R, L).astype(jnp.float32)

    kernel = functools.partial(
        _if_neuron_chunk_kernel,
        tc=tc,
        thresh=float(thresh),
        alpha_v=float(alpha_v),
        alpha_t=float(alpha_t),
        tau_t=float(tau_t),
        v_rest=float(v_rest),
        dt=float(dt),
        duration_refrac=float(duration_refrac),
    )

    spikes_i8, trace_hist, v_new, rc_new = pl.pallas_call(
        kernel,
        out_shape=(
            jax.ShapeDtypeStruct((T, R, L), jnp.int8),      # spike history (0/1)
            jax.ShapeDtypeStruct((T, R, L), jnp.float32),   # trace history
            jax.ShapeDtypeStruct((R, L), jnp.float32),      # final v
            jax.ShapeDtypeStruct((R, L), jnp.float32),      # final refrac
        ),
        grid_spec=pltpu.PrefetchScalarGridSpec(
            num_scalar_prefetch=0,
            grid=(n_chunks,),
            in_specs=[
                pl.BlockSpec((tc, R, L), lambda c: (c, 0, 0)),   # x_fold chunk
                pl.BlockSpec((R, L), lambda c: (0, 0)),          # v0
                pl.BlockSpec((R, L), lambda c: (0, 0)),          # trace0
                pl.BlockSpec((R, L), lambda c: (0, 0)),          # refrac0
            ],
            out_specs=[
                pl.BlockSpec((tc, R, L), lambda c: (c, 0, 0)),   # spikes chunk
                pl.BlockSpec((tc, R, L), lambda c: (c, 0, 0)),   # trace chunk
                pl.BlockSpec((R, L), lambda c: (0, 0)),          # v (resident)
                pl.BlockSpec((R, L), lambda c: (0, 0)),          # refrac (resident)
            ],
            scratch_shapes=[pltpu.VMEM((R, L), jnp.float32)],    # trace carrier
        ),
        # Keep the recurrent v / refrac state genuinely in place.
        input_output_aliases={1: 2, 3: 3},
        compiler_params=pltpu.CompilerParams(
            dimension_semantics=("arbitrary",),  # recurrence over time chunks
        ),
    )(x_fold, flat(v_cell), flat(trace), flat(refrac))

    # int8 -> bool view-cast (4x less data than the previous f32 cast pass).
    spikes_hist = spikes_i8.reshape((T,) + cells_shape).astype(jnp.bool_)
    trace_hist_full = trace_hist.reshape((T,) + cells_shape)
    new_state = (
        v_new.reshape(cells_shape),
        trace_hist_full[-1],              # final trace == last per-step trace
        rc_new.reshape(cells_shape),
    )
    return (spikes_hist, trace_hist_full), new_state


if __name__ == "__main__":
    # cells_shape = (batch, channels, H, W); S incoming synapses per neuron; T fused timesteps.
    B, C, H, W = 2, 4, 16, 16
    S = 8
    T = 8
    cells_shape = (B, C, H, W)

    # IFNeuron hyperparameters (deterministic, in-script).
    thresh_center = 1.0
    v_rest = 0.0
    alpha_v = 0.4
    alpha_t = 1.0
    dt = 1.0
    duration_refrac = 3.0
    tau_t = 0.8

    # State after init_neuron(): v_cell = v_rest, trace = 0, refrac = 0, thresh = thresh_center.
    v_cell = jnp.full(cells_shape, v_rest, dtype=jnp.float32)
    trace = jnp.zeros(cells_shape, dtype=jnp.float32)
    refrac = jnp.zeros(cells_shape, dtype=jnp.float32)

    # Incoming presynaptic spikes: bernoulli 0/1 float, shape (T,) + cells_shape + (S,).
    key = jax.random.PRNGKey(0)
    x_seq = (jax.random.uniform(key, (T,) + cells_shape + (S,)) < 0.3).astype(jnp.float32)

    fwd = jax.jit(
        functools.partial(
            if_neuron_forward_sequence,
            thresh=thresh_center,
            alpha_v=alpha_v,
            alpha_t=alpha_t,
            tau_t=tau_t,
            v_rest=v_rest,
            dt=dt,
            duration_refrac=duration_refrac,
        )
    )

    (spikes_hist, trace_hist), (v_new, tr_new, rc_new) = fwd(x_seq, v_cell, trace, refrac)
    jax.block_until_ready((spikes_hist, trace_hist, v_new, tr_new, rc_new))

    # Pure-JAX reference reproducing the PyTorch module step by step.
    v_r, tr_r, rc_r = v_cell, trace, refrac
    ok = True
    for t in range(T):
        xf = x_seq[t].sum(-1)
        v_r = v_r + alpha_v * xf * (rc_r == 0.0).astype(jnp.float32)
        sp = v_r >= thresh_center
        tr_r = tr_r * tau_t + alpha_t * sp.astype(jnp.float32)
        if duration_refrac > 0:
            rc_r = jnp.where(rc_r > 0.0, rc_r - dt, rc_r)
            rc_r = rc_r + duration_refrac * sp.astype(jnp.float32)
        v_r = jnp.where(sp, v_rest, v_r)
        ok &= bool(jnp.all(spikes_hist[t] == sp))
        ok &= bool(jnp.allclose(trace_hist[t], tr_r, atol=1e-6))
    ok &= bool(jnp.allclose(v_new, v_r, atol=1e-6))
    ok &= bool(jnp.allclose(tr_new, tr_r, atol=1e-6))
    ok &= bool(jnp.allclose(rc_new, rc_r, atol=1e-6))
    assert ok, "Pallas IFNeuron kernel mismatch vs reference"

    print("KERNEL_OK")
</pallas_src>

<mosaic_0001>
module attributes {stable_mosaic.version = 11 : i64} {
  func.func @_if_neuron_chunk_kernel(%arg0: i32, %arg1: memref<8x16x128xbf16, #tpu.memory_space<vmem>>, %arg2: memref<16x128xf32, #tpu.memory_space<vmem>>, %arg3: memref<16x128xf32, #tpu.memory_space<vmem>>, %arg4: memref<16x128xf32, #tpu.memory_space<vmem>>, %arg5: memref<8x16x128xi8, #tpu.memory_space<vmem>>, %arg6: memref<8x16x128xf32, #tpu.memory_space<vmem>>, %arg7: memref<16x128xf32, #tpu.memory_space<vmem>>, %arg8: memref<16x128xf32, #tpu.memory_space<vmem>>, %arg9: memref<16x128xf32, #tpu.memory_space<vmem>>) attributes {dimension_semantics = [#tpu.dimension_semantics<arbitrary>], iteration_bounds = array<i64: 1>, scalar_prefetch = 0 : i64, scratch_operands = 1 : i64, tpu.core_type = #tpu.core_type<tc>, window_params = [{transform_indices = @transform_0, window_bounds = array<i64: 8, 16, 128>}, {pipeline_mode = #tpu.pipeline_mode<synchronous>, transform_indices = @transform_1, window_bounds = array<i64: 16, 128>}, {pipeline_mode = #tpu.pipeline_mode<synchronous>, transform_indices = @transform_2, window_bounds = array<i64: 16, 128>}, {pipeline_mode = #tpu.pipeline_mode<synchronous>, transform_indices = @transform_3, window_bounds = array<i64: 16, 128>}, {transform_indices = @transform_4, window_bounds = array<i64: 8, 16, 128>}, {transform_indices = @transform_5, window_bounds = array<i64: 8, 16, 128>}, {pipeline_mode = #tpu.pipeline_mode<synchronous>, transform_indices = @transform_6, window_bounds = array<i64: 16, 128>}, {pipeline_mode = #tpu.pipeline_mode<synchronous>, transform_indices = @transform_7, window_bounds = array<i64: 16, 128>}]} {
    %c0_i32 = arith.constant 0 : i32
    %0 = arith.cmpi eq, %arg0, %c0_i32 : i32
    %1 = arith.extui %0 : i1 to i32
    %c0_i32_0 = arith.constant 0 : i32
    %2 = arith.cmpi ne, %1, %c0_i32_0 : i32
    scf.if %2 {
      %c0_132 = arith.constant 0 : index
      %c0_133 = arith.constant 0 : index
      %305 = vector.load %arg2[%c0_132, %c0_133] : memref<16x128xf32, #tpu.memory_space<vmem>>, vector<16x128xf32>
      %c0_134 = arith.constant 0 : index
      %c0_135 = arith.constant 0 : index
      %306 = vector.load %arg7[%c0_134, %c0_135] : memref<16x128xf32, #tpu.memory_space<vmem>>, vector<16x128xf32>
      tpu.vector_store %arg7[%c0_134, %c0_135], %305 {strides = array<i32>} : memref<16x128xf32, #tpu.memory_space<vmem>>, vector<16x128xf32>,
      %c0_136 = arith.constant 0 : index
      %c0_137 = arith.constant 0 : index
      %307 = vector.load %arg4[%c0_136, %c0_137] : memref<16x128xf32, #tpu.memory_space<vmem>>, vector<16x128xf32>
      %c0_138 = arith.constant 0 : index
      %c0_139 = arith.constant 0 : index
      %308 = vector.load %arg8[%c0_138, %c0_139] : memref<16x128xf32, #tpu.memory_space<vmem>>, vector<16x128xf32>
      tpu.vector_store %arg8[%c0_138, %c0_139], %307 {strides = array<i32>} : memref<16x128xf32, #tpu.memory_space<vmem>>, vector<16x128xf32>,
      %c0_140 = arith.constant 0 : index
      %c0_141 = arith.constant 0 : index
      %309 = vector.load %arg3[%c0_140, %c0_141] : memref<16x128xf32, #tpu.memory_space<vmem>>, vector<16x128xf32>
      %c0_142 = arith.constant 0 : index
      %c0_143 = arith.constant 0 : index
      %310 = vector.load %arg9[%c0_142, %c0_143] : memref<16x128xf32, #tpu.memory_space<vmem>>, vector<16x128xf32>
      tpu.vector_store %arg9[%c0_142, %c0_143], %309 {strides = array<i32>} : memref<16x128xf32, #tpu.memory_space<vmem>>, vector<16x128xf32>,
    } else {
    }
    %c0 = arith.constant 0 : index
    %c0_1 = arith.constant 0 : index
    %3 = vector.load %arg7[%c0, %c0_1] : memref<16x128xf32, #tpu.memory_space<vmem>>, vector<16x128xf32>
    %c0_2 = arith.constant 0 : index
    %c0_3 = arith.constant 0 : index
    %4 = vector.load %arg9[%c0_2, %c0_3] : memref<16x128xf32, #tpu.memory_space<vmem>>, vector<16x128xf32>
    %c0_4 = arith.constant 0 : index
    %c0_5 = arith.constant 0 : index
    %5 = vector.load %arg8[%c0_4, %c0_5] : memref<16x128xf32, #tpu.memory_space<vmem>>, vector<16x128xf32>
    %c0_i32_6 = arith.constant 0 : i32
    %6 = arith.index_cast %c0_i32_6 : i32 to index
    %c0_7 = arith.constant 0 : index
    %c0_8 = arith.constant 0 : index
    %7 = vector.load %arg1[%6, %c0_7, %c0_8] : memref<8x16x128xbf16, #tpu.memory_space<vmem>>, vector<1x16x128xbf16>
    %8 = vector.shape_cast %7 : vector<1x16x128xbf16> to vector<16x128xbf16>
    %9 = arith.extf %8 : vector<16x128xbf16> to vector<16x128xf32>
    %cst = arith.constant 0.000000e+00 : f32
    %10 = vector.broadcast %cst : f32 to vector<16x128xf32>
    %11 = arith.cmpf ole, %5, %10 : vector<16x128xf32>
    %cst_9 = arith.constant 4.000000e-01 : f32
    %12 = vector.broadcast %cst_9 : f32 to vector<16x128xf32>
    %13 = arith.mulf %12, %9 : vector<16x128xf32>
    %14 = arith.addf %3, %13 : vector<16x128xf32>
    %15 = arith.select %11, %14, %3 : vector<16x128xi1>, vector<16x128xf32>
    %cst_10 = arith.constant 1.000000e+00 : f32
    %16 = vector.broadcast %cst_10 : f32 to vector<16x128xf32>
    %17 = arith.cmpf oge, %15, %16 : vector<16x128xf32>
    %18 = arith.extui %17 : vector<16x128xi1> to vector<16x128xi32>
    %19 = arith.sitofp %18 : vector<16x128xi32> to vector<16x128xf32>
    %cst_11 = arith.constant 8.000000e-01 : f32
    %20 = vector.broadcast %cst_11 : f32 to vector<16x128xf32>
    %21 = arith.mulf %4, %20 : vector<16x128xf32>
    %cst_12 = arith.constant 1.000000e+00 : f32
    %22 = vector.broadcast %cst_12 : f32 to vector<16x128xf32>
    %23 = arith.mulf %22, %19 : vector<16x128xf32>
    %24 = arith.addf %21, %23 : vector<16x128xf32>
    %cst_13 = arith.constant 1.000000e+00 : f32
    %25 = vector.broadcast %cst_13 : f32 to vector<16x128xf32>
    %26 = arith.subf %5, %25 : vector<16x128xf32>
    %cst_14 = arith.constant 0.000000e+00 : f32
    %27 = vector.broadcast %cst_14 : f32 to vector<16x128xf32>
    %28 = arith.maximumf %26, %27 : vector<16x128xf32>
    %cst_15 = arith.constant 3.000000e+00 : f32
    %29 = vector.broadcast %cst_15 : f32 to vector<16x128xf32>
    %30 = arith.mulf %29, %19 : vector<16x128xf32>
    %31 = arith.addf %28, %30 : vector<16x128xf32>
    %cst_16 = arith.constant 0.000000e+00 : f32
    %32 = vector.broadcast %cst_16 : f32 to vector<16x128xf32>
    %33 = arith.select %17, %32, %15 : vector<16x128xi1>, vector<16x128xf32>
    %34 = arith.extui %17 : vector<16x128xi1> to vector<16x128xi8>
    %35 = arith.index_cast %c0_i32_6 : i32 to index
    %c0_17 = arith.constant 0 : index
    %c0_18 = arith.constant 0 : index
    %36 = vector.load %arg5[%35, %c0_17, %c0_18] : memref<8x16x128xi8, #tpu.memory_space<vmem>>, vector<1x16x128xi8>
    %37 = vector.shape_cast %36 : vector<1x16x128xi8> to vector<16x128xi8>
    %38 = vector.shape_cast %34 : vector<16x128xi8> to vector<1x16x128xi8>
    tpu.vector_store %arg5[%35, %c0_17, %c0_18], %38 {strides = array<i32>} : memref<8x16x128xi8, #tpu.memory_space<vmem>>, vector<1x16x128xi8>,
    %39 = arith.index_cast %c0_i32_6 : i32 to index
    %c0_19 = arith.constant 0 : index
    %c0_20 = arith.constant 0 : index
    %40 = vector.load %arg6[%39, %c0_19, %c0_20] : memref<8x16x128xf32, #tpu.memory_space<vmem>>, vector<1x16x128xf32>
    %41 = vector.shape_cast %40 : vector<1x16x128xf32> to vector<16x128xf32>
    %42 = vector.shape_cast %24 : vector<16x128xf32> to vector<1x16x128xf32>
    tpu.vector_store %arg6[%39, %c0_19, %c0_20], %42 {strides = array<i32>} : memref<8x16x128xf32, #tpu.memory_space<vmem>>, vector<1x16x128xf32>,
    %c1_i32 = arith.constant 1 : i32
    %43 = arith.index_cast %c1_i32 : i32 to index
    %c0_21 = arith.constant 0 : index
    %c0_22 = arith.constant 0 : index
    %44 = vector.load %arg1[%43, %c0_21, %c0_22] : memref<8x16x128xbf16, #tpu.memory_space<vmem>>, vector<1x16x128xbf16>
    %45 = vector.shape_cast %44 : vector<1x16x128xbf16> to vector<16x128xbf16>
    %46 = arith.extf %45 : vector<16x128xbf16> to vector<16x128xf32>
    %cst_23 = arith.constant 0.000000e+00 : f32
    %47 = vector.broadcast %cst_23 : f32 to vector<16x128xf32>
    %48 = arith.cmpf ole, %31, %47 : vector<16x128xf32>
    %cst_24 = arith.constant 4.000000e-01 : f32
    %49 = vector.broadcast %cst_24 : f32 to vector<16x128xf32>
    %50 = arith.mulf %49, %46 : vector<16x128xf32>
    %51 = arith.addf %33, %50 : vector<16x128xf32>
    %52 = arith.select %48, %51, %33 : vector<16x128xi1>, vector<16x128xf32>
    %cst_25 = arith.constant 1.000000e+00 : f32
    %53 = vector.broadcast %cst_25 : f32 to vector<16x128xf32>
    %54 = arith.cmpf oge, %52, %53 : vector<16x128xf32>
    %55 = arith.extui %54 : vector<16x128xi1> to vector<16x128xi32>
    %56 = arith.sitofp %55 : vector<16x128xi32> to vector<16x128xf32>
    %cst_26 = arith.constant 8.000000e-01 : f32
    %57 = vector.broadcast %cst_26 : f32 to vector<16x128xf32>
    %58 = arith.mulf %24, %57 : vector<16x128xf32>
    %cst_27 = arith.constant 1.000000e+00 : f32
    %59 = vector.broadcast %cst_27 : f32 to vector<16x128xf32>
    %60 = arith.mulf %59, %56 : vector<16x128xf32>
    %61 = arith.addf %58, %60 : vector<16x128xf32>
    %cst_28 = arith.constant 1.000000e+00 : f32
    %62 = vector.broadcast %cst_28 : f32 to vector<16x128xf32>
    %63 = arith.subf %31, %62 : vector<16x128xf32>
    %cst_29 = arith.constant 0.000000e+00 : f32
    %64 = vector.broadcast %cst_29 : f32 to vector<16x128xf32>
    %65 = arith.maximumf %63, %64 : vector<16x128xf32>
    %cst_30 = arith.constant 3.000000e+00 : f32
    %66 = vector.broadcast %cst_30 : f32 to vector<16x128xf32>
    %67 = arith.mulf %66, %56 : vector<16x128xf32>
    %68 = arith.addf %65, %67 : vector<16x128xf32>
    %cst_31 = arith.constant 0.000000e+00 : f32
    %69 = vector.broadcast %cst_31 : f32 to vector<16x128xf32>
    %70 = arith.select %54, %69, %52 : vector<16x128xi1>, vector<16x128xf32>
    %71 = arith.extui %54 : vector<16x128xi1> to vector<16x128xi8>
    %72 = arith.index_cast %c1_i32 : i32 to index
    %c0_32 = arith.constant 0 : index
    %c0_33 = arith.constant 0 : index
    %73 = vector.load %arg5[%72, %c0_32, %c0_33] : memref<8x16x128xi8, #tpu.memory_space<vmem>>, vector<1x16x128xi8>
    %74 = vector.shape_cast %73 : vector<1x16x128xi8> to vector<16x128xi8>
    %75 = vector.shape_cast %71 : vector<16x128xi8> to vector<1x16x128xi8>
    tpu.vector_store %arg5[%72, %c0_32, %c0_33], %75 {strides = array<i32>} : memref<8x16x128xi8, #tpu.memory_space<vmem>>, vector<1x16x128xi8>,
    %76 = arith.index_cast %c1_i32 : i32 to index
    %c0_34 = arith.constant 0 : index
    %c0_35 = arith.constant 0 : index
    %77 = vector.load %arg6[%76, %c0_34, %c0_35] : memref<8x16x128xf32, #tpu.memory_space<vmem>>, vector<1x16x128xf32>
    %78 = vector.shape_cast %77 : vector<1x16x128xf32> to vector<16x128xf32>
    %79 = vector.shape_cast %61 : vector<16x128xf32> to vector<1x16x128xf32>
    tpu.vector_store %arg6[%76, %c0_34, %c0_35], %79 {strides = array<i32>} : memref<8x16x128xf32, #tpu.memory_space<vmem>>, vector<1x16x128xf32>,
    %c2_i32 = arith.constant 2 : i32
    %80 = arith.index_cast %c2_i32 : i32 to index
    %c0_36 = arith.constant 0 : index
    %c0_37 = arith.constant 0 : index
    %81 = vector.load %arg1[%80, %c0_36, %c0_37] : memref<8x16x128xbf16, #tpu.memory_space<vmem>>, vector<1x16x128xbf16>
    %82 = vector.shape_cast %81 : vector<1x16x128xbf16> to vector<16x128xbf16>
    %83 = arith.extf %82 : vector<16x128xbf16> to vector<16x128xf32>
    %cst_38 = arith.constant 0.000000e+00 : f32
    %84 = vector.broadcast %cst_38 : f32 to vector<16x128xf32>
    %85 = arith.cmpf ole, %68, %84 : vector<16x128xf32>
    %cst_39 = arith.constant 4.000000e-01 : f32
    %86 = vector.broadcast %cst_39 : f32 to vector<16x128xf32>
    %87 = arith.mulf %86, %83 : vector<16x128xf32>
    %88 = arith.addf %70, %87 : vector<16x128xf32>
    %89 = arith.select %85, %88, %70 : vector<16x128xi1>, vector<16x128xf32>
    %cst_40 = arith.constant 1.000000e+00 : f32
    %90 = vector.broadcast %cst_40 : f32 to vector<16x128xf32>
    %91 = arith.cmpf oge, %89, %90 : vector<16x128xf32>
    %92 = arith.extui %91 : vector<16x128xi1> to vector<16x128xi32>
    %93 = arith.sitofp %92 : vector<16x128xi32> to vector<16x128xf32>
    %cst_41 = arith.constant 8.000000e-01 : f32
    %94 = vector.broadcast %cst_41 : f32 to vector<16x128xf32>
    %95 = arith.mulf %61, %94 : vector<16x128xf32>
    %cst_42 = arith.constant 1.000000e+00 : f32
    %96 = vector.broadcast %cst_42 : f32 to vector<16x128xf32>
    %97 = arith.mulf %96, %93 : vector<16x128xf32>
    %98 = arith.addf %95, %97 : vector<16x128xf32>
    %cst_43 = arith.constant 1.000000e+00 : f32
    %99 = vector.broadcast %cst_43 : f32 to vector<16x128xf32>
    %100 = arith.subf %68, %99 : vector<16x128xf32>
    %cst_44 = arith.constant 0.000000e+00 : f32
    %101 = vector.broadcast %cst_44 : f32 to vector<16x128xf32>
    %102 = arith.maximumf %100, %101 : vector<16x128xf32>
    %cst_45 = arith.constant 3.000000e+00 : f32
    %103 = vector.broadcast %cst_45 : f32 to vector<16x128xf32>
    %104 = arith.mulf %103, %93 : vector<16x128xf32>
    %105 = arith.addf %102, %104 : vector<16x128xf32>
    %cst_46 = arith.constant 0.000000e+00 : f32
    %106 = vector.broadcast %cst_46 : f32 to vector<16x128xf32>
    %107 = arith.select %91, %106, %89 : vector<16x128xi1>, vector<16x128xf32>
    %108 = arith.extui %91 : vector<16x128xi1> to vector<16x128xi8>
    %109 = arith.index_cast %c2_i32 : i32 to index
    %c0_47 = arith.constant 0 : index
    %c0_48 = arith.constant 0 : index
    %110 = vector.load %arg5[%109, %c0_47, %c0_48] : memref<8x16x128xi8, #tpu.memory_space<vmem>>, vector<1x16x128xi8>
    %111 = vector.shape_cast %110 : vector<1x16x128xi8> to vector<16x128xi8>
    %112 = vector.shape_cast %108 : vector<16x128xi8> to vector<1x16x128xi8>
    tpu.vector_store %arg5[%109, %c0_47, %c0_48], %112 {strides = array<i32>} : memref<8x16x128xi8, #tpu.memory_space<vmem>>, vector<1x16x128xi8>,
    %113 = arith.index_cast %c2_i32 : i32 to index
    %c0_49 = arith.constant 0 : index
    %c0_50 = arith.constant 0 : index
    %114 = vector.load %arg6[%113, %c0_49, %c0_50] : memref<8x16x128xf32, #tpu.memory_space<vmem>>, vector<1x16x128xf32>
    %115 = vector.shape_cast %114 : vector<1x16x128xf32> to vector<16x128xf32>
    %116 = vector.shape_cast %98 : vector<16x128xf32> to vector<1x16x128xf32>
    tpu.vector_store %arg6[%113, %c0_49, %c0_50], %116 {strides = array<i32>} : memref<8x16x128xf32, #tpu.memory_space<vmem>>, vector<1x16x128xf32>,
    %c3_i32 = arith.constant 3 : i32
    %117 = arith.index_cast %c3_i32 : i32 to index
    %c0_51 = arith.constant 0 : index
    %c0_52 = arith.constant 0 : index
    %118 = vector.load %arg1[%117, %c0_51, %c0_52] : memref<8x16x128xbf16, #tpu.memory_space<vmem>>, vector<1x16x128xbf16>
    %119 = vector.shape_cast %118 : vector<1x16x128xbf16> to vector<16x128xbf16>
    %120 = arith.extf %119 : vector<16x128xbf16> to vector<16x128xf32>
    %cst_53 = arith.constant 0.000000e+00 : f32
    %121 = vector.broadcast %cst_53 : f32 to vector<16x128xf32>
    %122 = arith.cmpf ole, %105, %121 : vector<16x128xf32>
    %cst_54 = arith.constant 4.000000e-01 : f32
    %123 = vector.broadcast %cst_54 : f32 to vector<16x128xf32>
    %124 = arith.mulf %123, %120 : vector<16x128xf32>
    %125 = arith.addf %107, %124 : vector<16x128xf32>
    %126 = arith.select %122, %125, %107 : vector<16x128xi1>, vector<16x128xf32>
    %cst_55 = arith.constant 1.000000e+00 : f32
    %127 = vector.broadcast %cst_55 : f32 to vector<16x128xf32>
    %128 = arith.cmpf oge, %126, %127 : vector<16x128xf32>
    %129 = arith.extui %128 : vector<16x128xi1> to vector<16x128xi32>
    %130 = arith.sitofp %129 : vector<16x128xi32> to vector<16x128xf32>
    %cst_56 = arith.constant 8.000000e-01 : f32
    %131 = vector.broadcast %cst_56 : f32 to vector<16x128xf32>
    %132 = arith.mulf %98, %131 : vector<16x128xf32>
    %cst_57 = arith.constant 1.000000e+00 : f32
    %133 = vector.broadcast %cst_57 : f32 to vector<16x128xf32>
    %134 = arith.mulf %133, %130 : vector<16x128xf32>
    %135 = arith.addf %132, %134 : vector<16x128xf32>
    %cst_58 = arith.constant 1.000000e+00 : f32
    %136 = vector.broadcast %cst_58 : f32 to vector<16x128xf32>
    %137 = arith.subf %105, %136 : vector<16x128xf32>
    %cst_59 = arith.constant 0.000000e+00 : f32
    %138 = vector.broadcast %cst_59 : f32 to vector<16x128xf32>
    %139 = arith.maximumf %137, %138 : vector<16x128xf32>
    %cst_60 = arith.constant 3.000000e+00 : f32
    %140 = vector.broadcast %cst_60 : f32 to vector<16x128xf32>
    %141 = arith.mulf %140, %130 : vector<16x128xf32>
    %142 = arith.addf %139, %141 : vector<16x128xf32>
    %cst_61 = arith.constant 0.000000e+00 : f32
    %143 = vector.broadcast %cst_61 : f32 to vector<16x128xf32>
    %144 = arith.select %128, %143, %126 : vector<16x128xi1>, vector<16x128xf32>
    %145 = arith.extui %128 : vector<16x128xi1> to vector<16x128xi8>
    %146 = arith.index_cast %c3_i32 : i32 to index
    %c0_62 = arith.constant 0 : index
    %c0_63 = arith.constant 0 : index
    %147 = vector.load %arg5[%146, %c0_62, %c0_63] : memref<8x16x128xi8, #tpu.memory_space<vmem>>, vector<1x16x128xi8>
    %148 = vector.shape_cast %147 : vector<1x16x128xi8> to vector<16x128xi8>
    %149 = vector.shape_cast %145 : vector<16x128xi8> to vector<1x16x128xi8>
    tpu.vector_store %arg5[%146, %c0_62, %c0_63], %149 {strides = array<i32>} : memref<8x16x128xi8, #tpu.memory_space<vmem>>, vector<1x16x128xi8>,
    %150 = arith.index_cast %c3_i32 : i32 to index
    %c0_64 = arith.constant 0 : index
    %c0_65 = arith.constant 0 : index
    %151 = vector.load %arg6[%150, %c0_64, %c0_65] : memref<8x16x128xf32, #tpu.memory_space<vmem>>, vector<1x16x128xf32>
    %152 = vector.shape_cast %151 : vector<1x16x128xf32> to vector<16x128xf32>
    %153 = vector.shape_cast %135 : vector<16x128xf32> to vector<1x16x128xf32>
    tpu.vector_store %arg6[%150, %c0_64, %c0_65], %153 {strides = array<i32>} : memref<8x16x128xf32, #tpu.memory_space<vmem>>, vector<1x16x128xf32>,
    %c4_i32 = arith.constant 4 : i32
    %154 = arith.index_cast %c4_i32 : i32 to index
    %c0_66 = arith.constant 0 : index
    %c0_67 = arith.constant 0 : index
    %155 = vector.load %arg1[%154, %c0_66, %c0_67] : memref<8x16x128xbf16, #tpu.memory_space<vmem>>, vector<1x16x128xbf16>
    %156 = vector.shape_cast %155 : vector<1x16x128xbf16> to vector<16x128xbf16>
    %157 = arith.extf %156 : vector<16x128xbf16> to vector<16x128xf32>
    %cst_68 = arith.constant 0.000000e+00 : f32
    %158 = vector.broadcast %cst_68 : f32 to vector<16x128xf32>
    %159 = arith.cmpf ole, %142, %158 : vector<16x128xf32>
    %cst_69 = arith.constant 4.000000e-01 : f32
    %160 = vector.broadcast %cst_69 : f32 to vector<16x128xf32>
    %161 = arith.mulf %160, %157 : vector<16x128xf32>
    %162 = arith.addf %144, %161 : vector<16x128xf32>
    %163 = arith.select %159, %162, %144 : vector<16x128xi1>, vector<16x128xf32>
    %cst_70 = arith.constant 1.000000e+00 : f32
    %164 = vector.broadcast %cst_70 : f32 to vector<16x128xf32>
    %165 = arith.cmpf oge, %163, %164 : vector<16x128xf32>
    %166 = arith.extui %165 : vector<16x128xi1> to vector<16x128xi32>
    %167 = arith.sitofp %166 : vector<16x128xi32> to vector<16x128xf32>
    %cst_71 = arith.constant 8.000000e-01 : f32
    %168 = vector.broadcast %cst_71 : f32 to vector<16x128xf32>
    %169 = arith.mulf %135, %168 : vector<16x128xf32>
    %cst_72 = arith.constant 1.000000e+00 : f32
    %170 = vector.broadcast %cst_72 : f32 to vector<16x128xf32>
    %171 = arith.mulf %170, %167 : vector<16x128xf32>
    %172 = arith.addf %169, %171 : vector<16x128xf32>
    %cst_73 = arith.constant 1.000000e+00 : f32
    %173 = vector.broadcast %cst_73 : f32 to vector<16x128xf32>
    %174 = arith.subf %142, %173 : vector<16x128xf32>
    %cst_74 = arith.constant 0.000000e+00 : f32
    %175 = vector.broadcast %cst_74 : f32 to vector<16x128xf32>
    %176 = arith.maximumf %174, %175 : vector<16x128xf32>
    %cst_75 = arith.constant 3.000000e+00 : f32
    %177 = vector.broadcast %cst_75 : f32 to vector<16x128xf32>
    %178 = arith.mulf %177, %167 : vector<16x128xf32>
    %179 = arith.addf %176, %178 : vector<16x128xf32>
    %cst_76 = arith.constant 0.000000e+00 : f32
    %180 = vector.broadcast %cst_76 : f32 to vector<16x128xf32>
    %181 = arith.select %165, %180, %163 : vector<16x128xi1>, vector<16x128xf32>
    %182 = arith.extui %165 : vector<16x128xi1> to vector<16x128xi8>
    %183 = arith.index_cast %c4_i32 : i32 to index
    %c0_77 = arith.constant 0 : index
    %c0_78 = arith.constant 0 : index
    %184 = vector.load %arg5[%183, %c0_77, %c0_78] : memref<8x16x128xi8, #tpu.memory_space<vmem>>, vector<1x16x128xi8>
    %185 = vector.shape_cast %184 : vector<1x16x128xi8> to vector<16x128xi8>
    %186 = vector.shape_cast %182 : vector<16x128xi8> to vector<1x16x128xi8>
    tpu.vector_store %arg5[%183, %c0_77, %c0_78], %186 {strides = array<i32>} : memref<8x16x128xi8, #tpu.memory_space<vmem>>, vector<1x16x128xi8>,
    %187 = arith.index_cast %c4_i32 : i32 to index
    %c0_79 = arith.constant 0 : index
    %c0_80 = arith.constant 0 : index
    %188 = vector.load %arg6[%187, %c0_79, %c0_80] : memref<8x16x128xf32, #tpu.memory_space<vmem>>, vector<1x16x128xf32>
    %189 = vector.shape_cast %188 : vector<1x16x128xf32> to vector<16x128xf32>
    %190 = vector.shape_cast %172 : vector<16x128xf32> to vector<1x16x128xf32>
    tpu.vector_store %arg6[%187, %c0_79, %c0_80], %190 {strides = array<i32>} : memref<8x16x128xf32, #tpu.memory_space<vmem>>, vector<1x16x128xf32>,
    %c5_i32 = arith.constant 5 : i32
    %191 = arith.index_cast %c5_i32 : i32 to index
    %c0_81 = arith.constant 0 : index
    %c0_82 = arith.constant 0 : index
    %192 = vector.load %arg1[%191, %c0_81, %c0_82] : memref<8x16x128xbf16, #tpu.memory_space<vmem>>, vector<1x16x128xbf16>
    %193 = vector.shape_cast %192 : vector<1x16x128xbf16> to vector<16x128xbf16>
    %194 = arith.extf %193 : vector<16x128xbf16> to vector<16x128xf32>
    %cst_83 = arith.constant 0.000000e+00 : f32
    %195 = vector.broadcast %cst_83 : f32 to vector<16x128xf32>
    %196 = arith.cmpf ole, %179, %195 : vector<16x128xf32>
    %cst_84 = arith.constant 4.000000e-01 : f32
    %197 = vector.broadcast %cst_84 : f32 to vector<16x128xf32>
    %198 = arith.mulf %197, %194 : vector<16x128xf32>
    %199 = arith.addf %181, %198 : vector<16x128xf32>
    %200 = arith.select %196, %199, %181 : vector<16x128xi1>, vector<16x128xf32>
    %cst_85 = arith.constant 1.000000e+00 : f32
    %201 = vector.broadcast %cst_85 : f32 to vector<16x128xf32>
    %202 = arith.cmpf oge, %200, %201 : vector<16x128xf32>
    %203 = arith.extui %202 : vector<16x128xi1> to vector<16x128xi32>
    %204 = arith.sitofp %203 : vector<16x128xi32> to vector<16x128xf32>
    %cst_86 = arith.constant 8.000000e-01 : f32
    %205 = vector.broadcast %cst_86 : f32 to vector<16x128xf32>
    %206 = arith.mulf %172, %205 : vector<16x128xf32>
    %cst_87 = arith.constant 1.000000e+00 : f32
    %207 = vector.broadcast %cst_87 : f32 to vector<16x128xf32>
    %208 = arith.mulf %207, %204 : vector<16x128xf32>
    %209 = arith.addf %206, %208 : vector<16x128xf32>
    %cst_88 = arith.constant 1.000000e+00 : f32
    %210 = vector.broadcast %cst_88 : f32 to vector<16x128xf32>
    %211 = arith.subf %179, %210 : vector<16x128xf32>
    %cst_89 = arith.constant 0.000000e+00 : f32
    %212 = vector.broadcast %cst_89 : f32 to vector<16x128xf32>
    %213 = arith.maximumf %211, %212 : vector<16x128xf32>
    %cst_90 = arith.constant 3.000000e+00 : f32
    %214 = vector.broadcast %cst_90 : f32 to vector<16x128xf32>
    %215 = arith.mulf %214, %204 : vector<16x128xf32>
    %216 = arith.addf %213, %215 : vector<16x128xf32>
    %cst_91 = arith.constant 0.000000e+00 : f32
    %217 = vector.broadcast %cst_91 : f32 to vector<16x128xf32>
    %218 = arith.select %202, %217, %200 : vector<16x128xi1>, vector<16x128xf32>
    %219 = arith.extui %202 : vector<16x128xi1> to vector<16x128xi8>
    %220 = arith.index_cast %c5_i32 : i32 to index
    %c0_92 = arith.constant 0 : index
    %c0_93 = arith.constant 0 : index
    %221 = vector.load %arg5[%220, %c0_92, %c0_93] : memref<8x16x128xi8, #tpu.memory_space<vmem>>, vector<1x16x128xi8>
    %222 = vector.shape_cast %221 : vector<1x16x128xi8> to vector<16x128xi8>
    %223 = vector.shape_cast %219 : vector<16x128xi8> to vector<1x16x128xi8>
    tpu.vector_store %arg5[%220, %c0_92, %c0_93], %223 {strides = array<i32>} : memref<8x16x128xi8, #tpu.memory_space<vmem>>, vector<1x16x128xi8>,
    %224 = arith.index_cast %c5_i32 : i32 to index
    %c0_94 = arith.constant 0 : index
    %c0_95 = arith.constant 0 : index
    %225 = vector.load %arg6[%224, %c0_94, %c0_95] : memref<8x16x128xf32, #tpu.memory_space<vmem>>, vector<1x16x128xf32>
    %226 = vector.shape_cast %225 : vector<1x16x128xf32> to vector<16x128xf32>
    %227 = vector.shape_cast %209 : vector<16x128xf32> to vector<1x16x128xf32>
    tpu.vector_store %arg6[%224, %c0_94, %c0_95], %227 {strides = array<i32>} : memref<8x16x128xf32, #tpu.memory_space<vmem>>, vector<1x16x128xf32>,
    %c6_i32 = arith.constant 6 : i32
    %228 = arith.index_cast %c6_i32 : i32 to index
    %c0_96 = arith.constant 0 : index
    %c0_97 = arith.constant 0 : index
    %229 = vector.load %arg1[%228, %c0_96, %c0_97] : memref<8x16x128xbf16, #tpu.memory_space<vmem>>, vector<1x16x128xbf16>
    %230 = vector.shape_cast %229 : vector<1x16x128xbf16> to vector<16x128xbf16>
    %231 = arith.extf %230 : vector<16x128xbf16> to vector<16x128xf32>
    %cst_98 = arith.constant 0.000000e+00 : f32
    %232 = vector.broadcast %cst_98 : f32 to vector<16x128xf32>
    %233 = arith.cmpf ole, %216, %232 : vector<16x128xf32>
    %cst_99 = arith.constant 4.000000e-01 : f32
    %234 = vector.broadcast %cst_99 : f32 to vector<16x128xf32>
    %235 = arith.mulf %234, %231 : vector<16x128xf32>
    %236 = arith.addf %218, %235 : vector<16x128xf32>
    %237 = arith.select %233, %236, %218 : vector<16x128xi1>, vector<16x128xf32>
    %cst_100 = arith.constant 1.000000e+00 : f32
    %238 = vector.broadcast %cst_100 : f32 to vector<16x128xf32>
    %239 = arith.cmpf oge, %237, %238 : vector<16x128xf32>
    %240 = arith.extui %239 : vector<16x128xi1> to vector<16x128xi32>
    %241 = arith.sitofp %240 : vector<16x128xi32> to vector<16x128xf32>
    %cst_101 = arith.constant 8.000000e-01 : f32
    %242 = vector.broadcast %cst_101 : f32 to vector<16x128xf32>
    %243 = arith.mulf %209, %242 : vector<16x128xf32>
    %cst_102 = arith.constant 1.000000e+00 : f32
    %244 = vector.broadcast %cst_102 : f32 to vector<16x128xf32>
    %245 = arith.mulf %244, %241 : vector<16x128xf32>
    %246 = arith.addf %243, %245 : vector<16x128xf32>
    %cst_103 = arith.constant 1.000000e+00 : f32
    %247 = vector.broadcast %cst_103 : f32 to vector<16x128xf32>
    %248 = arith.subf %216, %247 : vector<16x128xf32>
    %cst_104 = arith.constant 0.000000e+00 : f32
    %249 = vector.broadcast %cst_104 : f32 to vector<16x128xf32>
    %250 = arith.maximumf %248, %249 : vector<16x128xf32>
    %cst_105 = arith.constant 3.000000e+00 : f32
    %251 = vector.broadcast %cst_105 : f32 to vector<16x128xf32>
    %252 = arith.mulf %251, %241 : vector<16x128xf32>
    %253 = arith.addf %250, %252 : vector<16x128xf32>
    %cst_106 = arith.constant 0.000000e+00 : f32
    %254 = vector.broadcast %cst_106 : f32 to vector<16x128xf32>
    %255 = arith.select %239, %254, %237 : vector<16x128xi1>, vector<16x128xf32>
    %256 = arith.extui %239 : vector<16x128xi1> to vector<16x128xi8>
    %257 = arith.index_cast %c6_i32 : i32 to index
    %c0_107 = arith.constant 0 : index
    %c0_108 = arith.constant 0 : index
    %258 = vector.load %arg5[%257, %c0_107, %c0_108] : memref<8x16x128xi8, #tpu.memory_space<vmem>>, vector<1x16x128xi8>
    %259 = vector.shape_cast %258 : vector<1x16x128xi8> to vector<16x128xi8>
    %260 = vector.shape_cast %256 : vector<16x128xi8> to vector<1x16x128xi8>
    tpu.vector_store %arg5[%257, %c0_107, %c0_108], %260 {strides = array<i32>} : memref<8x16x128xi8, #tpu.memory_space<vmem>>, vector<1x16x128xi8>,
    %261 = arith.index_cast %c6_i32 : i32 to index
    %c0_109 = arith.constant 0 : index
    %c0_110 = arith.constant 0 : index
    %262 = vector.load %arg6[%261, %c0_109, %c0_110] : memref<8x16x128xf32, #tpu.memory_space<vmem>>, vector<1x16x128xf32>
    %263 = vector.shape_cast %262 : vector<1x16x128xf32> to vector<16x128xf32>
    %264 = vector.shape_cast %246 : vector<16x128xf32> to vector<1x16x128xf32>
    tpu.vector_store %arg6[%261, %c0_109, %c0_110], %264 {strides = array<i32>} : memref<8x16x128xf32, #tpu.memory_space<vmem>>, vector<1x16x128xf32>,
    %c7_i32 = arith.constant 7 : i32
    %265 = arith.index_cast %c7_i32 : i32 to index
    %c0_111 = arith.constant 0 : index
    %c0_112 = arith.constant 0 : index
    %266 = vector.load %arg1[%265, %c0_111, %c0_112] : memref<8x16x128xbf16, #tpu.memory_space<vmem>>, vector<1x16x128xbf16>
    %267 = vector.shape_cast %266 : vector<1x16x128xbf16> to vector<16x128xbf16>
    %268 = arith.extf %267 : vector<16x128xbf16> to vector<16x128xf32>
    %cst_113 = arith.constant 0.000000e+00 : f32
    %269 = vector.broadcast %cst_113 : f32 to vector<16x128xf32>
    %270 = arith.cmpf ole, %253, %269 : vector<16x128xf32>
    %cst_114 = arith.constant 4.000000e-01 : f32
    %271 = vector.broadcast %cst_114 : f32 to vector<16x128xf32>
    %272 = arith.mulf %271, %268 : vector<16x128xf32>
    %273 = arith.addf %255, %272 : vector<16x128xf32>
    %274 = arith.select %270, %273, %255 : vector<16x128xi1>, vector<16x128xf32>
    %cst_115 = arith.constant 1.000000e+00 : f32
    %275 = vector.broadcast %cst_115 : f32 to vector<16x128xf32>
    %276 = arith.cmpf oge, %274, %275 : vector<16x128xf32>
    %277 = arith.extui %276 : vector<16x128xi1> to vector<16x128xi32>
    %278 = arith.sitofp %277 : vector<16x128xi32> to vector<16x128xf32>
    %cst_116 = arith.constant 8.000000e-01 : f32
    %279 = vector.broadcast %cst_116 : f32 to vector<16x128xf32>
    %280 = arith.mulf %246, %279 : vector<16x128xf32>
    %cst_117 = arith.constant 1.000000e+00 : f32
    %281 = vector.broadcast %cst_117 : f32 to vector<16x128xf32>
    %282 = arith.mulf %281, %278 : vector<16x128xf32>
    %283 = arith.addf %280, %282 : vector<16x128xf32>
    %cst_118 = arith.constant 1.000000e+00 : f32
    %284 = vector.broadcast %cst_118 : f32 to vector<16x128xf32>
    %285 = arith.subf %253, %284 : vector<16x128xf32>
    %cst_119 = arith.constant 0.000000e+00 : f32
    %286 = vector.broadcast %cst_119 : f32 to vector<16x128xf32>
    %287 = arith.maximumf %285, %286 : vector<16x128xf32>
    %cst_120 = arith.constant 3.000000e+00 : f32
    %288 = vector.broadcast %cst_120 : f32 to vector<16x128xf32>
    %289 = arith.mulf %288, %278 : vector<16x128xf32>
    %290 = arith.addf %287, %289 : vector<16x128xf32>
    %cst_121 = arith.constant 0.000000e+00 : f32
    %291 = vector.broadcast %cst_121 : f32 to vector<16x128xf32>
    %292 = arith.select %276, %291, %274 : vector<16x128xi1>, vector<16x128xf32>
    %293 = arith.extui %276 : vector<16x128xi1> to vector<16x128xi8>
    %294 = arith.index_cast %c7_i32 : i32 to index
    %c0_122 = arith.constant 0 : index
    %c0_123 = arith.constant 0 : index
    %295 = vector.load %arg5[%294, %c0_122, %c0_123] : memref<8x16x128xi8, #tpu.memory_space<vmem>>, vector<1x16x128xi8>
    %296 = vector.shape_cast %295 : vector<1x16x128xi8> to vector<16x128xi8>
    %297 = vector.shape_cast %293 : vector<16x128xi8> to vector<1x16x128xi8>
    tpu.vector_store %arg5[%294, %c0_122, %c0_123], %297 {strides = array<i32>} : memref<8x16x128xi8, #tpu.memory_space<vmem>>, vector<1x16x128xi8>,
    %298 = arith.index_cast %c7_i32 : i32 to index
    %c0_124 = arith.constant 0 : index
    %c0_125 = arith.constant 0 : index
    %299 = vector.load %arg6[%298, %c0_124, %c0_125] : memref<8x16x128xf32, #tpu.memory_space<vmem>>, vector<1x16x128xf32>
    %300 = vector.shape_cast %299 : vector<1x16x128xf32> to vector<16x128xf32>
    %301 = vector.shape_cast %283 : vector<16x128xf32> to vector<1x16x128xf32>
    tpu.vector_store %arg6[%298, %c0_124, %c0_125], %301 {strides = array<i32>} : memref<8x16x128xf32, #tpu.memory_space<vmem>>, vector<1x16x128xf32>,
    %c8_i32 = arith.constant 8 : i32
    %c0_126 = arith.constant 0 : index
    %c0_127 = arith.constant 0 : index
    %302 = vector.load %arg7[%c0_126, %c0_127] : memref<16x128xf32, #tpu.memory_space<vmem>>, vector<16x128xf32>
    tpu.vector_store %arg7[%c0_126, %c0_127], %292 {strides = array<i32>} : memref<16x128xf32, #tpu.memory_space<vmem>>, vector<16x128xf32>,
    %c0_128 = arith.constant 0 : index
    %c0_129 = arith.constant 0 : index
    %303 = vector.load %arg9[%c0_128, %c0_129] : memref<16x128xf32, #tpu.memory_space<vmem>>, vector<16x128xf32>
    tpu.vector_store %arg9[%c0_128, %c0_129], %283 {strides = array<i32>} : memref<16x128xf32, #tpu.memory_space<vmem>>, vector<16x128xf32>,
    %c0_130 = arith.constant 0 : index
    %c0_131 = arith.constant 0 : index
    %304 = vector.load %arg8[%c0_130, %c0_131] : memref<16x128xf32, #tpu.memory_space<vmem>>, vector<16x128xf32>
    tpu.vector_store %arg8[%c0_130, %c0_131], %290 {strides = array<i32>} : memref<16x128xf32, #tpu.memory_space<vmem>>, vector<16x128xf32>,
    return
  }
  func.func @transform_0(%arg0: i32) -> (i32, i32, i32) {
    %c0_i32 = arith.constant 0 : i32
    %c0_i32_0 = arith.constant 0 : i32
    %c0_i32_1 = arith.constant 0 : i32
    return %arg0, %c0_i32, %c0_i32_0 : i32, i32, i32
  }
  func.func @transform_1(%arg0: i32) -> (i32, i32) {
    %c0_i32 = arith.constant 0 : i32
    %c0_i32_0 = arith.constant 0 : i32
    %c0_i32_1 = arith.constant 0 : i32
    return %c0_i32, %c0_i32_0 : i32, i32
  }
  func.func @transform_2(%arg0: i32) -> (i32, i32) {
    %c0_i32 = arith.constant 0 : i32
    %c0_i32_0 = arith.constant 0 : i32
    %c0_i32_1 = arith.constant 0 : i32
    return %c0_i32, %c0_i32_0 : i32, i32
  }
  func.func @transform_3(%arg0: i32) -> (i32, i32) {
    %c0_i32 = arith.constant 0 : i32
    %c0_i32_0 = arith.constant 0 : i32
    %c0_i32_1 = arith.constant 0 : i32
    return %c0_i32, %c0_i32_0 : i32, i32
  }
  func.func @transform_4(%arg0: i32) -> (i32, i32, i32) {
    %c0_i32 = arith.constant 0 : i32
    %c0_i32_0 = arith.constant 0 : i32
    %c0_i32_1 = arith.constant 0 : i32
    return %arg0, %c0_i32, %c0_i32_0 : i32, i32, i32
  }
  func.func @transform_5(%arg0: i32) -> (i32, i32, i32) {
    %c0_i32 = arith.constant 0 : i32
    %c0_i32_0 = arith.constant 0 : i32
    %c0_i32_1 = arith.constant 0 : i32
    return %arg0, %c0_i32, %c0_i32_0 : i32, i32, i32
  }
  func.func @transform_6(%arg0: i32) -> (i32, i32) {
    %c0_i32 = arith.constant 0 : i32
    %c0_i32_0 = arith.constant 0 : i32
    %c0_i32_1 = arith.constant 0 : i32
    return %c0_i32, %c0_i32_0 : i32, i32
  }
  func.func @transform_7(%arg0: i32) -> (i32, i32) {
    %c0_i32 = arith.constant 0 : i32
    %c0_i32_0 = arith.constant 0 : i32
    %c0_i32_1 = arith.constant 0 : i32
    return %c0_i32, %c0_i32_0 : i32, i32
  }
}

</mosaic_0001>

<llo_original>
// kernel: if_neuron_forward_sequence.1
$region0: #{if_neuron_forward_sequence.1}
  #allocation0 [shape = 'u32[]', space=smem, size = 0x4, offset = 0x4, fixed_abs, tag = 'smem constant byte address 0x4 - core index']
  #allocation1 [shape = 'u32[144,128]{1,0:T(1,128)}', space=vmem, size = 0x12000, scoped, tag = 'internal scratch']
  #allocation2 [shape = 'f32[16,128]{1,0:T(8,128)}', space=vmem, size = 0x2000, scoped, tag = 'scratch operand']
  %s0 = inlined_call_operand.vmem [shape: bf16[8,16,128], index: 0, kind: input, shape index: {}]
  %s1 = inlined_call_operand.vmem [shape: f32[16,128], index: 1, kind: input, shape index: {}, may-alias: {1,6}]
  %s2 = inlined_call_operand.vmem [shape: f32[16,128], index: 2, kind: input, shape index: {}]
  %s3 = inlined_call_operand.vmem [shape: f32[16,128], index: 3, kind: input, shape index: {}, may-alias: {3,7}]
  %s4 = inlined_call_operand.vmem [shape: s8[8,16,128], index: 4, kind: output, shape index: {0}]
  %s5 = inlined_call_operand.vmem [shape: f32[8,16,128], index: 5, kind: output, shape index: {1}]
  %s6 = inlined_call_operand.vmem [shape: f32[16,128], index: 6, kind: output, shape index: {2}, may-alias: {1,6}]
  %s7 = inlined_call_operand.vmem [shape: f32[16,128], index: 7, kind: output, shape index: {3}, may-alias: {3,7}]
  %8 = xla_tuple %s4, %s5, %s6, %s7
  %s9 = sld [smem:[#allocation0]]
  $region54: #{if_neuron_forward_sequence.1} parent=0
    _
  %s11 = ssub.s32 1, %s9
  %s12 = scalar_select 0, %s11, %s9
  // Predicated region
  $region2: #{if_neuron_forward_sequence.1} parent=0 // pred_check
    _
  $region3: #{if_neuron_forward_sequence.1} parent=0 // pred_check_branch
    %14 = sbr.rel (0) target = $region5
  $region4: #{if_neuron_forward_sequence.1} parent=0 // pred_region
    _
  $region5: #{if_neuron_forward_sequence.1} parent=0 // pred_fallthru
    _
  // Predicated region
  $region6: #{if_neuron_forward_sequence.1} parent=0 // pred_check
    _
  $region7: #{if_neuron_forward_sequence.1} parent=0 // pred_check_branch
    %16 = sbr.rel (0) target = $region9
  $region8: #{if_neuron_forward_sequence.1} parent=0 // pred_region
    _
  $region9: #{if_neuron_forward_sequence.1} parent=0 // pred_fallthru
    _
  // Predicated region
  $region10: #{if_neuron_forward_sequence.1} parent=0 // pred_check
    _
  $region11: #{if_neuron_forward_sequence.1} parent=0 // pred_check_branch
    %18 = sbr.rel (0) target = $region13
  $region12: #{if_neuron_forward_sequence.1} parent=0 // pred_region
    _
  $region13: #{if_neuron_forward_sequence.1} parent=0 // pred_fallthru
    _
  // Predicated region
  $region14: #{if_neuron_forward_sequence.1} parent=0 // pred_check
    _
  $region15: #{if_neuron_forward_sequence.1} parent=0 // pred_check_branch
    %20 = sbr.rel (0) target = $region17
  $region16: #{if_neuron_forward_sequence.1} parent=0 // pred_region
    _
  $region17: #{if_neuron_forward_sequence.1} parent=0 // pred_fallthru
    _
  %p23 = scmp.eq.s32.totalorder 0, 0
  // Predicated region
  $region18: #{if_neuron_forward_sequence.1} parent=0 // pred_check
    %p24 = pneg %p23
  $region19: #{if_neuron_forward_sequence.1} parent=0 // pred_check_branch
    %26 = sbr.rel (%p24) target = $region21
  $region20: #{if_neuron_forward_sequence.1} parent=0 // pred_region
    %v27 = vld [vmem:[%s1] sm:$0xff]
    %v28 = vld [vmem:[%s1 + $0x8] sm:$0xff]
    %29 = vst [vmem:[%s6] sm:$0xff] %v27
    %30 = vst [vmem:[%s6 + $0x8] sm:$0xff] %v28
    %v31 = vld [vmem:[%s3] sm:$0xff]
    %v32 = vld [vmem:[%s3 + $0x8] sm:$0xff]
    %33 = vst [vmem:[%s7] sm:$0xff] %v31
    %34 = vst [vmem:[%s7 + $0x8] sm:$0xff] %v32
    %v35 = vld [vmem:[%s2] sm:$0xff]
    %v36 = vld [vmem:[%s2 + $0x8] sm:$0xff]
    %37 = vst [vmem:[#allocation2] sm:$0xff] %v35
    %38 = vst [vmem:[#allocation2 + $0x8] sm:$0xff] %v36
  $region21: #{if_neuron_forward_sequence.1} parent=0 // pred_fallthru
    _
  %v39 = vld [vmem:[%s6] sm:$0xff]
  %v40 = vld [vmem:[%s6 + $0x8] sm:$0xff]
  %v41 = vld [vmem:[#allocation2] sm:$0xff]
  %v42 = vld [vmem:[#allocation2 + $0x8] sm:$0xff]
  %v43 = vld [vmem:[%s7] sm:$0xff]
  %v44 = vld [vmem:[%s7 + $0x8] sm:$0xff]
  %v45 = vld [vmem:[%s0] sm:$0xf]
  %v46 = vld [vmem:[%s0 + $0x4] sm:$0xf]
  %v47 = vunpack.c.l.bf16 %v45
  %v48 = vunpack.c.l.bf16 %v46
  %vm49 = vcmp.le.f32.partialorder %v43, 0.0
  %vm50 = vcmp.le.f32.partialorder %v44, 0.0
  %v51 = vmul.f32 %v47, 0.4
  %v52 = vmul.f32 %v48, 0.4
  %v53 = vadd.f32 %v39, %v51
  %v54 = vadd.f32 %v40, %v52
  %v55 = vsel %vm49, %v53, %v39
  %v56 = vsel %vm50, %v54, %v40
  %vm57 = vcmp.ge.f32.partialorder %v55, 1.0
  %vm58 = vcmp.ge.f32.partialorder %v56, 1.0
  %v59 = vsel %vm57, 1, 0
  %v60 = vsel %vm58, 1, 0
  %v61 = vcvt.s32.f32 %v59
  %v62 = vcvt.s32.f32 %v60
  %v63 = vmul.f32 %v41, 0.8
  %v64 = vmul.f32 %v42, 0.8
  %v65 = vadd.f32 %v63, %v61
  %v66 = vadd.f32 %v64, %v62
  %v67 = vsub.f32 %v43, 1.0
  %v68 = vsub.f32 %v44, 1.0
  %v69 = vmax.f32 %v67, 0.0
  %v70 = vmax.f32 %v68, 0.0
  %v71 = vmul.f32 %v61, 3.0
  %v72 = vmul.f32 %v62, 3.0
  %v73 = vadd.f32 %v69, %v71
  %v74 = vadd.f32 %v70, %v72
  %v75 = vsel %vm57, 0.0, %v55
  %v76 = vsel %vm58, 0.0, %v56
  %vm77 = vmpackc.low %vm58, %vm57
  %vm78 = vmpackc.even %vm77, %vm77
  %v79 = vsel %vm78, 16843009, 0
  %v80 = vunpack.c.0.s8 %v79
  %v81 = vunpack.c.1.s8 %v79
  %v82 = vpack.c.b16 %v80, %v80
  %v83 = vpack.c.b8 %v82, %v82
  %v84 = vpack.c.b16 %v81, %v81
  %v85 = vpack.c.b8 %v84, %v84
  %86 = vst [vmem:[%s4] sm:$0x3] %v83
  %87 = vst [vmem:[%s4 + $0x2] sm:$0x3] %v85
  %88 = vst [vmem:[%s5] sm:$0xff] %v65
  %89 = vst [vmem:[%s5 + $0x8] sm:$0xff] %v66
  %s90 = scalar_lea.vmem %s0, 8
  %v91 = vld [vmem:[%s90] sm:$0xf]
  %v92 = vld [vmem:[%s90 + $0x4] sm:$0xf]
  %v93 = vunpack.c.l.bf16 %v91
  %v94 = vunpack.c.l.bf16 %v92
  %vm95 = vcmp.le.f32.partialorder %v73, 0.0
  %vm96 = vcmp.le.f32.partialorder %v74, 0.0
  %v97 = vmul.f32 %v93, 0.4
  %v98 = vmul.f32 %v94, 0.4
  %v99 = vadd.f32 %v75, %v97
  %v100 = vadd.f32 %v76, %v98
  %v101 = vsel %vm95, %v99, %v75
  %v102 = vsel %vm96, %v100, %v76
  %vm103 = vcmp.ge.f32.partialorder %v101, 1.0
  %vm104 = vcmp.ge.f32.partialorder %v102, 1.0
  %v105 = vsel %vm103, 1, 0
  %v106 = vsel %vm104, 1, 0
  %v107 = vcvt.s32.f32 %v105
  %v108 = vcvt.s32.f32 %v106
  %v109 = vmul.f32 %v65, 0.8
  %v110 = vmul.f32 %v66, 0.8
  %v111 = vadd.f32 %v109, %v107
  %v112 = vadd.f32 %v110, %v108
  %v113 = vsub.f32 %v73, 1.0
  %v114 = vsub.f32 %v74, 1.0
  %v115 = vmax.f32 %v113, 0.0
  %v116 = vmax.f32 %v114, 0.0
  %v117 = vmul.f32 %v107, 3.0
  %v118 = vmul.f32 %v108, 3.0
  %v119 = vadd.f32 %v115, %v117
  %v120 = vadd.f32 %v116, %v118
  %v121 = vsel %vm103, 0.0, %v101
  %v122 = vsel %vm104, 0.0, %v102
  %vm123 = vmpackc.low %vm104, %vm103
  %vm124 = vmpackc.even %vm123, %vm123
  %v125 = vsel %vm124, 16843009, 0
  %v126 = vunpack.c.0.s8 %v125
  %v127 = vunpack.c.1.s8 %v125
  %v128 = vpack.c.b16 %v126, %v126
  %v129 = vpack.c.b8 %v128, %v128
  %v130 = vpack.c.b16 %v127, %v127
  %v131 = vpack.c.b8 %v130, %v130
  %s132 = scalar_lea.vmem %s4, 4
  %133 = vst [vmem:[%s132] sm:$0x3] %v129
  %134 = vst [vmem:[%s132 + $0x2] sm:$0x3] %v131
  %s135 = scalar_lea.vmem %s5, 16
  %136 = vst [vmem:[%s135] sm:$0xff] %v111
  %137 = vst [vmem:[%s135 + $0x8] sm:$0xff] %v112
  %s138 = scalar_lea.vmem %s0, 16
  %v139 = vld [vmem:[%s138] sm:$0xf]
  %v140 = vld [vmem:[%s138 + $0x4] sm:$0xf]
  %v141 = vunpack.c.l.bf16 %v139
  %v142 = vunpack.c.l.bf16 %v140
  %vm143 = vcmp.le.f32.partialorder %v119, 0.0
  %vm144 = vcmp.le.f32.partialorder %v120, 0.0
  %v145 = vmul.f32 %v141, 0.4
  %v146 = vmul.f32 %v142, 0.4
  %v147 = vadd.f32 %v121, %v145
  %v148 = vadd.f32 %v122, %v146
  %v149 = vsel %vm143, %v147, %v121
  %v150 = vsel %vm144, %v148, %v122
  %vm151 = vcmp.ge.f32.partialorder %v149, 1.0
  %vm152 = vcmp.ge.f32.partialorder %v150, 1.0
  %v153 = vsel %vm151, 1, 0
  %v154 = vsel %vm152, 1, 0
  %v155 = vcvt.s32.f32 %v153
  %v156 = vcvt.s32.f32 %v154
  %v157 = vmul.f32 %v111, 0.8
  %v158 = vmul.f32 %v112, 0.8
  %v159 = vadd.f32 %v157, %v155
  %v160 = vadd.f32 %v158, %v156
  %v161 = vsub.f32 %v119, 1.0
  %v162 = vsub.f32 %v120, 1.0
  %v163 = vmax.f32 %v161, 0.0
  %v164 = vmax.f32 %v162, 0.0
  %v165 = vmul.f32 %v155, 3.0
  %v166 = vmul.f32 %v156, 3.0
  %v167 = vadd.f32 %v163, %v165
  %v168 = vadd.f32 %v164, %v166
  %v169 = vsel %vm151, 0.0, %v149
  %v170 = vsel %vm152, 0.0, %v150
  %vm171 = vmpackc.low %vm152, %vm151
  %vm172 = vmpackc.even %vm171, %vm171
  %v173 = vsel %vm172, 16843009, 0
  %v174 = vunpack.c.0.s8 %v173
  %v175 = vunpack.c.1.s8 %v173
  %v176 = vpack.c.b16 %v174, %v174
  %v177 = vpack.c.b8 %v176, %v176
  %v178 = vpack.c.b16 %v175, %v175
  %v179 = vpack.c.b8 %v178, %v178
  %s180 = scalar_lea.vmem %s4, 8
  %181 = vst [vmem:[%s180] sm:$0x3] %v177
  %182 = vst [vmem:[%s180 + $0x2] sm:$0x3] %v179
  %s183 = scalar_lea.vmem %s5, 32
  %184 = vst [vmem:[%s183] sm:$0xff] %v159
  %185 = vst [vmem:[%s183 + $0x8] sm:$0xff] %v160
  %s186 = scalar_lea.vmem %s0, 24
  %v187 = vld [vmem:[%s186] sm:$0xf]
  %v188 = vld [vmem:[%s186 + $0x4] sm:$0xf]
  %v189 = vunpack.c.l.bf16 %v187
  %v190 = vunpack.c.l.bf16 %v188
  %vm191 = vcmp.le.f32.partialorder %v167, 0.0
  %vm192 = vcmp.le.f32.partialorder %v168, 0.0
  %v193 = vmul.f32 %v189, 0.4
  %v194 = vmul.f32 %v190, 0.4
  %v195 = vadd.f32 %v169, %v193
  %v196 = vadd.f32 %v170, %v194
  %v197 = vsel %vm191, %v195, %v169
  %v198 = vsel %vm192, %v196, %v170
  %vm199 = vcmp.ge.f32.partialorder %v197, 1.0
  %vm200 = vcmp.ge.f32.partialorder %v198, 1.0
  %v201 = vsel %vm199, 1, 0
  %v202 = vsel %vm200, 1, 0
  %v203 = vcvt.s32.f32 %v201
  %v204 = vcvt.s32.f32 %v202
  %v205 = vmul.f32 %v159, 0.8
  %v206 = vmul.f32 %v160, 0.8
  %v207 = vadd.f32 %v205, %v203
  %v208 = vadd.f32 %v206, %v204
  %v209 = vsub.f32 %v167, 1.0
  %v210 = vsub.f32 %v168, 1.0
  %v211 = vmax.f32 %v209, 0.0
  %v212 = vmax.f32 %v210, 0.0
  %v213 = vmul.f32 %v203, 3.0
  %v214 = vmul.f32 %v204, 3.0
  %v215 = vadd.f32 %v211, %v213
  %v216 = vadd.f32 %v212, %v214
  %v217 = vsel %vm199, 0.0, %v197
  %v218 = vsel %vm200, 0.0, %v198
  %vm219 = vmpackc.low %vm200, %vm199
  %vm220 = vmpackc.even %vm219, %vm219
  %v221 = vsel %vm220, 16843009, 0
  %v222 = vunpack.c.0.s8 %v221
  %v223 = vunpack.c.1.s8 %v221
  %v224 = vpack.c.b16 %v222, %v222
  %v225 = vpack.c.b8 %v224, %v224
  %v226 = vpack.c.b16 %v223, %v223
  %v227 = vpack.c.b8 %v226, %v226
  %s228 = scalar_lea.vmem %s4, 12
  %229 = vst [vmem:[%s228] sm:$0x3] %v225
  %230 = vst [vmem:[%s228 + $0x2] sm:$0x3] %v227
  %s231 = scalar_lea.vmem %s5, 48
  %232 = vst [vmem:[%s231] sm:$0xff] %v207
  %233 = vst [vmem:[%s231 + $0x8] sm:$0xff] %v208
  %s234 = scalar_lea.vmem %s0, 32
  %v235 = vld [vmem:[%s234] sm:$0xf]
  %v236 = vld [vmem:[%s234 + $0x4] sm:$0xf]
  %v237 = vunpack.c.l.bf16 %v235
  %v238 = vunpack.c.l.bf16 %v236
  %vm239 = vcmp.le.f32.partialorder %v215, 0.0
  %vm240 = vcmp.le.f32.partialorder %v216, 0.0
  %v241 = vmul.f32 %v237, 0.4
  %v242 = vmul.f32 %v238, 0.4
  %v243 = vadd.f32 %v217, %v241
  %v244 = vadd.f32 %v218, %v242
  %v245 = vsel %vm239, %v243, %v217
  %v246 = vsel %vm240, %v244, %v218
  %vm247 = vcmp.ge.f32.partialorder %v245, 1.0
  %vm248 = vcmp.ge.f32.partialorder %v246, 1.0
  %v249 = vsel %vm247, 1, 0
  %v250 = vsel %vm248, 1, 0
  %v251 = vcvt.s32.f32 %v249
  %v252 = vcvt.s32.f32 %v250
  %v253 = vmul.f32 %v207, 0.8
  %v254 = vmul.f32 %v208, 0.8
  %v255 = vadd.f32 %v253, %v251
  %v256 = vadd.f32 %v254, %v252
  %v257 = vsub.f32 %v215, 1.0
  %v258 = vsub.f32 %v216, 1.0
  %v259 = vmax.f32 %v257, 0.0
  %v260 = vmax.f32 %v258, 0.0
  %v261 = vmul.f32 %v251, 3.0
  %v262 = vmul.f32 %v252, 3.0
  %v263 = vadd.f32 %v259, %v261
  %v264 = vadd.f32 %v260, %v262
  %v265 = vsel %vm247, 0.0, %v245
  %v266 = vsel %vm248, 0.0, %v246
  %vm267 = vmpackc.low %vm248, %vm247
  %vm268 = vmpackc.even %vm267, %vm267
  %v269 = vsel %vm268, 16843009, 0
  %v270 = vunpack.c.0.s8 %v269
  %v271 = vunpack.c.1.s8 %v269
  %v272 = vpack.c.b16 %v270, %v270
  %v273 = vpack.c.b8 %v272, %v272
  %v274 = vpack.c.b16 %v271, %v271
  %v275 = vpack.c.b8 %v274, %v274
  %s276 = scalar_lea.vmem %s4, 16
  %277 = vst [vmem:[%s276] sm:$0x3] %v273
  %278 = vst [vmem:[%s276 + $0x2] sm:$0x3] %v275
  %s279 = scalar_lea.vmem %s5, 64
  %280 = vst [vmem:[%s279] sm:$0xff] %v255
  %281 = vst [vmem:[%s279 + $0x8] sm:$0xff] %v256
  %s282 = scalar_lea.vmem %s0, 40
  %v283 = vld [vmem:[%s282] sm:$0xf]
  %v284 = vld [vmem:[%s282 + $0x4] sm:$0xf]
  %v285 = vunpack.c.l.bf16 %v283
  %v286 = vunpack.c.l.bf16 %v284
  %vm287 = vcmp.le.f32.partialorder %v263, 0.0
  %vm288 = vcmp.le.f32.partialorder %v264, 0.0
  %v289 = vmul.f32 %v285, 0.4
  %v290 = vmul.f32 %v286, 0.4
  %v291 = vadd.f32 %v265, %v289
  %v292 = vadd.f32 %v266, %v290
  %v293 = vsel %vm287, %v291, %v265
  %v294 = vsel %vm288, %v292, %v266
  %vm295 = vcmp.ge.f32.partialorder %v293, 1.0
  %vm296 = vcmp.ge.f32.partialorder %v294, 1.0
  %v297 = vsel %vm295, 1, 0
  %v298 = vsel %vm296, 1, 0
  %v299 = vcvt.s32.f32 %v297
  %v300 = vcvt.s32.f32 %v298
  %v301 = vmul.f32 %v255, 0.8
  %v302 = vmul.f32 %v256, 0.8
  %v303 = vadd.f32 %v301, %v299
  %v304 = vadd.f32 %v302, %v300
  %v305 = vsub.f32 %v263, 1.0
  %v306 = vsub.f32 %v264, 1.0
  %v307 = vmax.f32 %v305, 0.0
  %v308 = vmax.f32 %v306, 0.0
  %v309 = vmul.f32 %v299, 3.0
  %v310 = vmul.f32 %v300, 3.0
  %v311 = vadd.f32 %v307, %v309
  %v312 = vadd.f32 %v308, %v310
  %v313 = vsel %vm295, 0.0, %v293
  %v314 = vsel %vm296, 0.0, %v294
  %vm315 = vmpackc.low %vm296, %vm295
  %vm316 = vmpackc.even %vm315, %vm315
  %v317 = vsel %vm316, 16843009, 0
  %v318 = vunpack.c.0.s8 %v317
  %v319 = vunpack.c.1.s8 %v317
  %v320 = vpack.c.b16 %v318, %v318
  %v321 = vpack.c.b8 %v320, %v320
  %v322 = vpack.c.b16 %v319, %v319
  %v323 = vpack.c.b8 %v322, %v322
  %s324 = scalar_lea.vmem %s4, 20
  %325 = vst [vmem:[%s324] sm:$0x3] %v321
  %326 = vst [vmem:[%s324 + $0x2] sm:$0x3] %v323
  %s327 = scalar_lea.vmem %s5, 80
  %328 = vst [vmem:[%s327] sm:$0xff] %v303
  %329 = vst [vmem:[%s327 + $0x8] sm:$0xff] %v304
  %s330 = scalar_lea.vmem %s0, 48
  %v331 = vld [vmem:[%s330] sm:$0xf]
  %v332 = vld [vmem:[%s330 + $0x4] sm:$0xf]
  %v333 = vunpack.c.l.bf16 %v331
  %v334 = vunpack.c.l.bf16 %v332
  %vm335 = vcmp.le.f32.partialorder %v311, 0.0
  %vm336 = vcmp.le.f32.partialorder %v312, 0.0
  %v337 = vmul.f32 %v333, 0.4
  %v338 = vmul.f32 %v334, 0.4
  %v339 = vadd.f32 %v313, %v337
  %v340 = vadd.f32 %v314, %v338
  %v341 = vsel %vm335, %v339, %v313
  %v342 = vsel %vm336, %v340, %v314
  %vm343 = vcmp.ge.f32.partialorder %v341, 1.0
  %vm344 = vcmp.ge.f32.partialorder %v342, 1.0
  %v345 = vsel %vm343, 1, 0
  %v346 = vsel %vm344, 1, 0
  %v347 = vcvt.s32.f32 %v345
  %v348 = vcvt.s32.f32 %v346
  %v349 = vmul.f32 %v303, 0.8
  %v350 = vmul.f32 %v304, 0.8
  %v351 = vadd.f32 %v349, %v347
  %v352 = vadd.f32 %v350, %v348
  %v353 = vsub.f32 %v311, 1.0
  %v354 = vsub.f32 %v312, 1.0
  %v355 = vmax.f32 %v353, 0.0
  %v356 = vmax.f32 %v354, 0.0
  %v357 = vmul.f32 %v347, 3.0
  %v358 = vmul.f32 %v348, 3.0
  %v359 = vadd.f32 %v355, %v357
  %v360 = vadd.f32 %v356, %v358
  %v361 = vsel %vm343, 0.0, %v341
  %v362 = vsel %vm344, 0.0, %v342
  %vm363 = vmpackc.low %vm344, %vm343
  %vm364 = vmpackc.even %vm363, %vm363
  %v365 = vsel %vm364, 16843009, 0
  %v366 = vunpack.c.0.s8 %v365
  %v367 = vunpack.c.1.s8 %v365
  %v368 = vpack.c.b16 %v366, %v366
  %v369 = vpack.c.b8 %v368, %v368
  %v370 = vpack.c.b16 %v367, %v367
  %v371 = vpack.c.b8 %v370, %v370
  %s372 = scalar_lea.vmem %s4, 24
  %373 = vst [vmem:[%s372] sm:$0x3] %v369
  %374 = vst [vmem:[%s372 + $0x2] sm:$0x3] %v371
  %s375 = scalar_lea.vmem %s5, 96
  %376 = vst [vmem:[%s375] sm:$0xff] %v351
  %377 = vst [vmem:[%s375 + $0x8] sm:$0xff] %v352
  %s378 = scalar_lea.vmem %s0, 56
  %v379 = vld [vmem:[%s378] sm:$0xf]
  %v380 = vld [vmem:[%s378 + $0x4] sm:$0xf]
  %v381 = vunpack.c.l.bf16 %v379
  %v382 = vunpack.c.l.bf16 %v380
  %vm383 = vcmp.le.f32.partialorder %v359, 0.0
  %vm384 = vcmp.le.f32.partialorder %v360, 0.0
  %v385 = vmul.f32 %v381, 0.4
  %v386 = vmul.f32 %v382, 0.4
  %v387 = vadd.f32 %v361, %v385
  %v388 = vadd.f32 %v362, %v386
  %v389 = vsel %vm383, %v387, %v361
  %v390 = vsel %vm384, %v388, %v362
  %vm391 = vcmp.ge.f32.partialorder %v389, 1.0
  %vm392 = vcmp.ge.f32.partialorder %v390, 1.0
  %v393 = vsel %vm391, 1, 0
  %v394 = vsel %vm392, 1, 0
  %v395 = vcvt.s32.f32 %v393
  %v396 = vcvt.s32.f32 %v394
  %v397 = vmul.f32 %v351, 0.8
  %v398 = vmul.f32 %v352, 0.8
  %v399 = vadd.f32 %v397, %v395
  %v400 = vadd.f32 %v398, %v396
  %v401 = vsub.f32 %v359, 1.0
  %v402 = vsub.f32 %v360, 1.0
  %v403 = vmax.f32 %v401, 0.0
  %v404 = vmax.f32 %v402, 0.0
  %v405 = vmul.f32 %v395, 3.0
  %v406 = vmul.f32 %v396, 3.0
  %v407 = vadd.f32 %v403, %v405
  %v408 = vadd.f32 %v404, %v406
  %v409 = vsel %vm391, 0.0, %v389
  %v410 = vsel %vm392, 0.0, %v390
  %vm411 = vmpackc.low %vm392, %vm391
  %vm412 = vmpackc.even %vm411, %vm411
  %v413 = vsel %vm412, 16843009, 0
  %v414 = vunpack.c.0.s8 %v413
  %v415 = vunpack.c.1.s8 %v413
  %v416 = vpack.c.b16 %v414, %v414
  %v417 = vpack.c.b8 %v416, %v416
  %v418 = vpack.c.b16 %v415, %v415
  %v419 = vpack.c.b8 %v418, %v418
  %s420 = scalar_lea.vmem %s4, 28
  %421 = vst [vmem:[%s420] sm:$0x3] %v417
  %422 = vst [vmem:[%s420 + $0x2] sm:$0x3] %v419
  %s423 = scalar_lea.vmem %s5, 112
  %424 = vst [vmem:[%s423] sm:$0xff] %v399
  %425 = vst [vmem:[%s423 + $0x8] sm:$0xff] %v400
  %426 = vst [vmem:[%s6] sm:$0xff] %v409
  %427 = vst [vmem:[%s6 + $0x8] sm:$0xff] %v410
  %428 = vst [vmem:[#allocation2] sm:$0xff] %v399
  %429 = vst [vmem:[#allocation2 + $0x8] sm:$0xff] %v400
  %430 = vst [vmem:[%s7] sm:$0xff] %v407
  %431 = vst [vmem:[%s7 + $0x8] sm:$0xff] %v408
  // Predicated region
  $region22: #{if_neuron_forward_sequence.1} parent=0 // pred_check
    _
  $region23: #{if_neuron_forward_sequence.1} parent=0 // pred_check_branch
    %433 = sbr.rel (0) target = $region25
  $region24: #{if_neuron_forward_sequence.1} parent=0 // pred_region
    _
  $region25: #{if_neuron_forward_sequence.1} parent=0 // pred_fallthru
    _
  // Predicated region
  $region26: #{if_neuron_forward_sequence.1} parent=0 // pred_check
    _
  $region27: #{if_neuron_forward_sequence.1} parent=0 // pred_check_branch
    %435 = sbr.rel (0) target = $region29
  $region28: #{if_neuron_forward_sequence.1} parent=0 // pred_region
    _
  $region29: #{if_neuron_forward_sequence.1} parent=0 // pred_fallthru
    _
  // Predicated region
  $region30: #{if_neuron_forward_sequence.1} parent=0 // pred_check
    _
  $region31: #{if_neuron_forward_sequence.1} parent=0 // pred_check_branch
    %437 = sbr.rel (0) target = $region33
  $region32: #{if_neuron_forward_sequence.1} parent=0 // pred_region
    _
  $region33: #{if_neuron_forward_sequence.1} parent=0 // pred_fallthru
    _
  // Predicated region
  $region34: #{if_neuron_forward_sequence.1} parent=0 // pred_check
    _
  $region35: #{if_neuron_forward_sequence.1} parent=0 // pred_check_branch
    %439 = sbr.rel (0) target = $region37
  $region36: #{if_neuron_forward_sequence.1} parent=0 // pred_region
    _
  $region37: #{if_neuron_forward_sequence.1} parent=0 // pred_fallthru
    _
  // Predicated region
  $region38: #{if_neuron_forward_sequence.1} parent=0 // pred_check
    _
  $region39: #{if_neuron_forward_sequence.1} parent=0 // pred_check_branch
    %441 = sbr.rel (0) target = $region41
  $region40: #{if_neuron_forward_sequence.1} parent=0 // pred_region
    _
  $region41: #{if_neuron_forward_sequence.1} parent=0 // pred_fallthru
    _
  // Predicated region
  $region42: #{if_neuron_forward_sequence.1} parent=0 // pred_check
    _
  $region43: #{if_neuron_forward_sequence.1} parent=0 // pred_check_branch
    %443 = sbr.rel (0) target = $region45
  $region44: #{if_neuron_forward_sequence.1} parent=0 // pred_region
    _
  $region45: #{if_neuron_forward_sequence.1} parent=0 // pred_fallthru
    _
  // Predicated region
  $region46: #{if_neuron_forward_sequence.1} parent=0 // pred_check
    _
  $region47: #{if_neuron_forward_sequence.1} parent=0 // pred_check_branch
    %445 = sbr.rel (0) target = $region49
  $region48: #{if_neuron_forward_sequence.1} parent=0 // pred_region
    _
  $region49: #{if_neuron_forward_sequence.1} parent=0 // pred_fallthru
    _
  // Predicated region
  $region50: #{if_neuron_forward_sequence.1} parent=0 // pred_check
    _
  $region51: #{if_neuron_forward_sequence.1} parent=0 // pred_check_branch
    %447 = sbr.rel (0) target = $region53
  $region52: #{if_neuron_forward_sequence.1} parent=0 // pred_region
    _
  $region53: #{if_neuron_forward_sequence.1} parent=0 // pred_fallthru
    _

</llo_original>
